<compile_context>
chip_gen: v5e
topology: v5e:2x2
jax: 0.10.0
libtpu: 0.0.40
codegen_flags: <defaults>
</compile_context>

<pallas_src>
import jax
import jax.numpy as jnp
from jax.experimental import pallas as pl
from jax.experimental.pallas import tpu as pltpu


def _add_pos_kernel(x_ref, pos_ref, o_ref):
    """o = x + pos on one (1, tc, tl) lane-dense block (single load, single store)."""
    o_ref[...] = x_ref[...] + pos_ref[...]


def _build_pos(channels: int, C: int, H: int, W: int, dtype) -> jax.Array:
    """Batch-invariant 2D sinusoidal encoding, shape (1, C, H*W)."""
    pos_x = jnp.arange(W, dtype=jnp.float32)
    pos_y = jnp.arange(H, dtype=jnp.float32)
    dim_t = jnp.arange(0, channels, 2, dtype=jnp.float32)
    dim_t = 10000.0 ** (dim_t / channels)
    pe_dim = 2 * dim_t.shape[0]                      # channels rounded up to even
    px = pos_x[:, None] / dim_t                      # (W, pe_dim // 2)
    py = pos_y[:, None] / dim_t                      # (H, pe_dim // 2)
    px = jnp.stack((jnp.sin(px), jnp.cos(px)), axis=-1).reshape(W, pe_dim)
    py = jnp.stack((jnp.sin(py), jnp.cos(py)), axis=-1).reshape(H, pe_dim)
    pos = jnp.concatenate(
        (jnp.broadcast_to(py[:, None, :], (H, W, pe_dim)),
         jnp.broadcast_to(px[None, :, :], (H, W, pe_dim))), axis=-1)  # (H, W, 2*pe_dim)
    pos = jnp.transpose(pos, (2, 0, 1))              # (2*pe_dim, H, W)
    return pos[:C].reshape(1, C, H * W).astype(dtype)


def _choose_tiles(C: int, L: int, itemsize: int,
                  budget_bytes: int = 8 * 1024 * 1024) -> tuple[int, int]:
    """Largest (tc, tl) so the 6 double-buffered blocks fit the VMEM budget.

    tc is a multiple of 8 dividing C (or C itself); tl is a multiple of 128
    dividing L (or L itself) -> every block satisfies the (8, 128) rule or
    spans the full dim.
    """
    c_cands = sorted({d for d in range(8, C + 1, 8) if C % d == 0} | {C})
    l_cands = sorted({d for d in range(128, L + 1, 128) if L % d == 0} | {L})

    def fits(tc, tl):
        return 6 * tc * tl * itemsize <= budget_bytes

    best = (c_cands[0], l_cands[0])                  # minimal legal tiles (fallback)
    best_sz = -1
    for tl in l_cands:
        for tc in c_cands:
            if fits(tc, tl):
                sz = tc * tl
                # prefer bigger blocks; tie-break toward lane-dense (bigger tl)
                if sz > best_sz or (sz == best_sz and tl > best[1]):
                    best, best_sz = (tc, tl), sz
    return best


def positional_encoding_2d(x: jax.Array, channels: int) -> jax.Array:
    """x: (B, C, H, W) with C <= 2 * ceil(channels / 2) * 2 (as the torch module requires)."""
    B, C, H, W = x.shape
    pe_dim = 2 * ((channels + 1) // 2)
    assert C <= 2 * pe_dim, "tensor channels must be <= 2 * self.channels"

    L = H * W
    itemsize = jnp.dtype(x.dtype).itemsize
    tc, tl = _choose_tiles(C, L, itemsize)
    nc, nl = C // tc, L // tl

    # Lane-dense layout; row-major reshape is free.
    x3 = x.reshape(B, C, L)
    pos3 = _build_pos(channels, C, H, W, x.dtype)    # (1, C, L), batch-invariant

    block_bytes = tc * tl * itemsize
    vmem_limit = int(max(6 * block_bytes + (1 << 20), 16 * 1024 * 1024))

    out3 = pl.pallas_call(
        _add_pos_kernel,
        out_shape=jax.ShapeDtypeStruct((B, C, L), x.dtype),
        grid_spec=pltpu.PrefetchScalarGridSpec(
            num_scalar_prefetch=0,
            # B is the fastest axis -> pos block resident in VMEM across batch.
            grid=(nc, nl, B),
            in_specs=[
                pl.BlockSpec((1, tc, tl), lambda c, l, b: (b, c, l)),   # x
                pl.BlockSpec((1, tc, tl), lambda c, l, b: (0, c, l)),   # pos (batch-invariant)
            ],
            out_specs=pl.BlockSpec((1, tc, tl), lambda c, l, b: (b, c, l)),
        ),
        compiler_params=pltpu.CompilerParams(
            dimension_semantics=("parallel", "parallel", "parallel"),
            vmem_limit_bytes=vmem_limit),
    )(x3, pos3)

    return out3.reshape(B, C, H, W)


def _reference(x: jax.Array, channels: int) -> jax.Array:
    """Pure-JAX transliteration of the PyTorch forward (for verification)."""
    B, ch, H, W = x.shape
    pos_x = jnp.arange(W, dtype=jnp.float32)
    pos_y = jnp.arange(H, dtype=jnp.float32)
    dim_t = jnp.arange(0, channels, 2, dtype=jnp.float32)
    dim_t = 10000.0 ** (dim_t / channels)
    pe_dim = 2 * dim_t.shape[0]
    px = pos_x[:, None] / dim_t
    py = pos_y[:, None] / dim_t
    px = jnp.stack((jnp.sin(px), jnp.cos(px)), axis=-1).reshape(W, pe_dim)
    py = jnp.stack((jnp.sin(py), jnp.cos(py)), axis=-1).reshape(H, pe_dim)
    pos = jnp.concatenate(
        (jnp.broadcast_to(py[:, None, :], (H, W, pe_dim)),
         jnp.broadcast_to(px[None, :, :], (H, W, pe_dim))), axis=-1)
    pos = jnp.transpose(pos, (2, 0, 1))                      # (2*pe_dim, H, W)
    pos = jnp.broadcast_to(pos[None], (B, 2 * pe_dim, H, W))
    return x + pos[:, :ch]


if __name__ == "__main__":
    channels = 4                  # PositionalEncoding2D(channels=4)
    B, C, H, W = 2, 8, 16, 16     # input tensor uses C = 2*channels channels

    key = jax.random.PRNGKey(0)
    x = jax.random.normal(key, (B, C, H, W), dtype=jnp.float32)

    ref = jax.block_until_ready(_reference(x, channels))

    out = positional_encoding_2d(x, channels)
    out = jax.block_until_ready(out)

    assert out.shape == (B, C, H, W)
    assert jnp.allclose(out, ref, atol=1e-5, rtol=1e-5), "mismatch vs reference"

    print("KERNEL_OK")
</pallas_src>

<mosaic_0001>
module attributes {stable_mosaic.version = 11 : i64} {
  func.func @_add_pos_kernel(%arg0: i32, %arg1: i32, %arg2: i32, %arg3: memref<1x8x256xf32, #tpu.memory_space<vmem>>, %arg4: memref<1x8x256xf32, #tpu.memory_space<vmem>>, %arg5: memref<1x8x256xf32, #tpu.memory_space<vmem>>) attributes {dimension_semantics = [#tpu.dimension_semantics<parallel>, #tpu.dimension_semantics<parallel>, #tpu.dimension_semantics<parallel>], iteration_bounds = array<i64: 1, 1, 2>, scalar_prefetch = 0 : i64, scratch_operands = 0 : i64, tpu.core_type = #tpu.core_type<tc>, window_params = [{transform_indices = @transform_0, window_bounds = array<i64: 1, 8, 256>}, {transform_indices = @transform_1, window_bounds = array<i64: 1, 8, 256>}, {transform_indices = @transform_2, window_bounds = array<i64: 1, 8, 256>}]} {
    %c0 = arith.constant 0 : index
    %c0_0 = arith.constant 0 : index
    %c0_1 = arith.constant 0 : index
    %0 = vector.load %arg3[%c0, %c0_0, %c0_1] : memref<1x8x256xf32, #tpu.memory_space<vmem>>, vector<1x8x256xf32>
    %c0_2 = arith.constant 0 : index
    %c0_3 = arith.constant 0 : index
    %c0_4 = arith.constant 0 : index
    %1 = vector.load %arg4[%c0_2, %c0_3, %c0_4] : memref<1x8x256xf32, #tpu.memory_space<vmem>>, vector<1x8x256xf32>
    %2 = arith.addf %0, %1 : vector<1x8x256xf32>
    %c0_5 = arith.constant 0 : index
    %c0_6 = arith.constant 0 : index
    %c0_7 = arith.constant 0 : index
    %3 = vector.load %arg5[%c0_5, %c0_6, %c0_7] : memref<1x8x256xf32, #tpu.memory_space<vmem>>, vector<1x8x256xf32>
    tpu.vector_store %arg5[%c0_5, %c0_6, %c0_7], %2 {strides = array<i32>} : memref<1x8x256xf32, #tpu.memory_space<vmem>>, vector<1x8x256xf32>,
    return
  }
  func.func @transform_0(%arg0: i32, %arg1: i32, %arg2: i32) -> (i32, i32, i32) {
    %c0_i32 = arith.constant 0 : i32
    return %arg2, %arg0, %arg1 : i32, i32, i32
  }
  func.func @transform_1(%arg0: i32, %arg1: i32, %arg2: i32) -> (i32, i32, i32) {
    %c0_i32 = arith.constant 0 : i32
    %c0_i32_0 = arith.constant 0 : i32
    return %c0_i32, %arg0, %arg1 : i32, i32, i32
  }
  func.func @transform_2(%arg0: i32, %arg1: i32, %arg2: i32) -> (i32, i32, i32) {
    %c0_i32 = arith.constant 0 : i32
    return %arg2, %arg0, %arg1 : i32, i32, i32
  }
}

</mosaic_0001>

<llo_original>
// kernel: tpu_custom_call.1
$region0: #{tpu_custom_call.1}
  #allocation0 [shape = 'u32[]', space=smem, size = 0x4, offset = 0x4, fixed_abs, tag = 'smem constant byte address 0x4 - core index']
  #allocation1 [shape = 'u32[72,128]{1,0:T(1,128)}', space=vmem, size = 0x9000, scoped, tag = 'internal scratch']
  %s0 = inlined_call_operand.hbm [shape: f32[2,8,256], index: 0, kind: input, shape index: {}]
  %s1 = inlined_call_operand.hbm [shape: f32[1,8,256], index: 1, kind: input, shape index: {}]
  %s2 = inlined_call_operand.hbm [shape: f32[2,8,256], index: 2, kind: output, shape index: {}]
  %s3 = sld [smem:[#allocation0]]
  $region49: #{tpu_custom_call.1} parent=0
    _
  %s5 = ssub.s32 1, %s3
  %s6 = scalar_select 0, %s5, %s3
  $region1: #{tpu_custom_call.1} parent=0
    #allocation2 [shape = 'u8[16384]{0}', space=vmem, size = 0x4000, scoped, tag = 'input window, operand 0']
    #allocation3 [shape = 's32[2]{0}', space=sflag, size = 0x8, scoped, tag = 'scoped memory for tpu_custom_call.1']
    #allocation4 [shape = 's32[2]{0}', space=sflag, size = 0x8, scoped, tag = 'scoped memory for tpu_custom_call.1']
    #allocation5 [shape = 'u8[8192]{0}', space=vmem, size = 0x2000, scoped, tag = 'input window, operand 1, single buffered']
    #allocation6 [shape = 's32[1]{0}', space=sflag, size = 0x4, scoped, tag = 'scoped memory for tpu_custom_call.1']
    #allocation7 [shape = 'u8[16384]{0}', space=vmem, size = 0x4000, scoped, tag = 'output window, operand 0']
    %7 = vsyncpa [#allocation3], 0
    %s8 = scalar_lea.sflag [#allocation3], 1
    %9 = vsyncpa %s8, 0
    %10 = vsyncpa [#allocation6], 0
    %11 = vsyncpa [#allocation4], 0
    %s12 = scalar_lea.sflag [#allocation4], 1
    %13 = vsyncpa %s12, 0
    loop: start=0, step=1, limit=4
    $region2: #{tpu_custom_call.1} parent=1 // loop_pre_header
      _
    $region3: #{tpu_custom_call.1} parent=1 // loop_header
      %s15 = sphi 0, %s19
      %p16 = scmp.ge.s32.totalorder %s15, 4
      %s22 = sphi 0, %s41
      %s23 = sphi 0, %s37
      %s24 = sphi 0, %s33
      %s25 = sphi 0, %s22
      %s26 = sphi 0, %s23
      %s27 = sphi 0, %s24
      %s28 = sphi 0, %s25
      %s29 = sphi 0, %s26
      %s30 = sphi 0, %s27
      %s48 = sphi 0, %s50
      %s51 = sphi 0, %s48
      %s52 = sphi 0, %s51
      %s68 = sphi 0, %s52
      %s76 = sphi 0, %s78
      %s79 = sphi 0, %s76
      %s80 = sphi 0, %s79
      %s96 = sphi 0, %s80
      %s106 = sphi 0, %s108
      %s109 = sphi 0, %s106
      %s110 = sphi 0, %s109
      %s126 = sphi 0, %s110
    $region4: #{tpu_custom_call.1} parent=1 // loop_header_branch
      %18 = sbr.rel (%p16) target = $region8
    $region5: #{tpu_custom_call.1} parent=1 // loop_body
      %s20 = ssub.s32 %s15, 1
      %s21 = ssub.s32 %s15, 2
      %s31 = sadd.s32 1, %s24
      %p32 = scmp.ge.s32.totalorder %s31, 2
      %s33 = scalar_select %p32, 0, %s31
      %s34 = sadd.s32 1, %s23
      %s35 = scalar_select %p32, %s34, %s23
      %p36 = scmp.ge.s32.totalorder %s35, 1
      %s37 = scalar_select %p36, 0, %s35
      %s38 = sadd.s32 1, %s22
      %s39 = scalar_select %p36, %s38, %s22
      %p40 = scmp.ge.s32.totalorder %s39, 1
      %s41 = scalar_select %p40, 0, %s39
      %s42 = ssub.s32 %s24, %s33
      %s43 = ssub.s32 %s22, %s41
      %s44 = sor.u32 %s42, %s43
      %s45 = ssub.s32 %s23, %s37
      %s46 = sor.u32 %s44, %s45
      %p47 = scmp.eq.s32.totalorder %s46, 0
      %s49 = sadd.s32 %s48, 1
      %s50 = scalar_select %p47, %s48, %s49
      %p53 = pneg %p47
      %p54 = scmp.eq.s32.totalorder %s15, 1
      %p55 = por %p53, %p54
      %p56 = scmp.ne.s32.totalorder %s48, %s51
      %p57 = scmp.eq.s32.totalorder %s15, 0
      %p58 = por %p56, %p57
      %p59 = scmp.ne.s32.totalorder %s48, %s51
      %p60 = scmp.eq.s32.totalorder %s20, 1
      %p61 = por %p59, %p60
      %p62 = scmp.ne.s32.totalorder %s51, %s52
      %p63 = scmp.eq.s32.totalorder %s20, 0
      %p64 = por %p62, %p63
      %p65 = scmp.ne.s32.totalorder %s51, %s52
      %p66 = scmp.eq.s32.totalorder %s21, 1
      %p67 = por %p65, %p66
      %p69 = scmp.ne.s32.totalorder %s52, %s68
      %p70 = scmp.eq.s32.totalorder %s21, 0
      %p71 = por %p69, %p70
      %s72 = ssub.s32 %s22, %s41
      %s73 = ssub.s32 %s23, %s37
      %s74 = sor.u32 %s72, %s73
      %p75 = scmp.eq.s32.totalorder %s74, 0
      %s77 = sadd.s32 %s76, 1
      %s78 = scalar_select %p75, %s76, %s77
      %p81 = pneg %p75
      %p82 = scmp.eq.s32.totalorder %s15, 1
      %p83 = por %p81, %p82
      %p84 = scmp.ne.s32.totalorder %s76, %s79
      %p85 = scmp.eq.s32.totalorder %s15, 0
      %p86 = por %p84, %p85
      %p87 = scmp.ne.s32.totalorder %s76, %s79
      %p88 = scmp.eq.s32.totalorder %s20, 1
      %p89 = por %p87, %p88
      %p90 = scmp.ne.s32.totalorder %s79, %s80
      %p91 = scmp.eq.s32.totalorder %s20, 0
      %p92 = por %p90, %p91
      %p93 = scmp.ne.s32.totalorder %s79, %s80
      %p94 = scmp.eq.s32.totalorder %s21, 1
      %p95 = por %p93, %p94
      %p97 = scmp.ne.s32.totalorder %s80, %s96
      %p98 = scmp.eq.s32.totalorder %s21, 0
      %p99 = por %p97, %p98
      %s100 = ssub.s32 %s24, %s33
      %s101 = ssub.s32 %s22, %s41
      %s102 = sor.u32 %s100, %s101
      %s103 = ssub.s32 %s23, %s37
      %s104 = sor.u32 %s102, %s103
      %p105 = scmp.eq.s32.totalorder %s104, 0
      %s107 = sadd.s32 %s106, 1
      %s108 = scalar_select %p105, %s106, %s107
      %p111 = pneg %p105
      %p112 = scmp.eq.s32.totalorder %s15, 1
      %p113 = por %p111, %p112
      %p114 = scmp.ne.s32.totalorder %s106, %s109
      %p115 = scmp.eq.s32.totalorder %s15, 0
      %p116 = por %p114, %p115
      %p117 = scmp.ne.s32.totalorder %s106, %s109
      %p118 = scmp.eq.s32.totalorder %s20, 1
      %p119 = por %p117, %p118
      %p120 = scmp.ne.s32.totalorder %s109, %s110
      %p121 = scmp.eq.s32.totalorder %s20, 0
      %p122 = por %p120, %p121
      %p123 = scmp.ne.s32.totalorder %s109, %s110
      %p124 = scmp.eq.s32.totalorder %s21, 1
      %p125 = por %p123, %p124
      %p127 = scmp.ne.s32.totalorder %s110, %s126
      %p128 = scmp.eq.s32.totalorder %s21, 0
      %p129 = por %p127, %p128
      %p130 = scmp.le.s32.totalorder 1, %s15
      %p131 = scmp.lt.s32.totalorder %s15, 3
      %p132 = pnand %p130, %p131
      %p133 = pneg %p132
      // Predicated region
      $region9: #{tpu_custom_call.1} parent=5 // pred_check
        _
      $region10: #{tpu_custom_call.1} parent=5 // pred_check_branch
        %135 = sbr.rel (%p132) target = $region12
      $region11: #{tpu_custom_call.1} parent=5 // pred_region
        %s136 = ssub.s32 %s15, 1
        // Predicated region
        $region13: #{tpu_custom_call.1} parent=11 // pred_check
          %p137 = pneg %p92
        $region14: #{tpu_custom_call.1} parent=11 // pred_check_branch
          %139 = sbr.rel (%p137) target = $region16
        $region15: #{tpu_custom_call.1} parent=11 // pred_region
          %s140 = smul.u32 2, %s26
          %142 = vsyncadd [#allocation6], 0
          %s143 = smul.addr %s25, 2
          %s144 = sadd.s32 %s140, %s143
          %s145 = smul.addr %s144, 8
          %s146 = scalar_lea.hbm %s1, %s145
          %s148 = sshll.u32 %s146, 4
          %s149 = int_to_ptr.hbm [resolvable:$true] %s148
          %s150 = sshll.u32 [#allocation5], 4
          %s151 = int_to_ptr.vmem [resolvable:$true] %s150
          %153 = dma.hbm_to_vmem [thread:$0]  %s149, 256, %s151, [#allocation6]
        $region16: #{tpu_custom_call.1} parent=11 // pred_fallthru
          _
      $region12: #{tpu_custom_call.1} parent=5 // pred_fallthru
        _
      %p154 = scmp.lt.s32.totalorder %s15, 2
      // Predicated region
      $region17: #{tpu_custom_call.1} parent=5 // pred_check
        %p155 = pneg %p154
      $region18: #{tpu_custom_call.1} parent=5 // pred_check_branch
        %157 = sbr.rel (%p155) target = $region20
      $region19: #{tpu_custom_call.1} parent=5 // pred_region
        // Predicated region
        $region21: #{tpu_custom_call.1} parent=19 // pred_check
          %p158 = pneg %p58
        $region22: #{tpu_custom_call.1} parent=19 // pred_check_branch
          %160 = sbr.rel (%p158) target = $region24
        $region23: #{tpu_custom_call.1} parent=19 // pred_region
          %s161 = sand.u32 %s48, 1
          %s162 = scalar_lea.sflag [#allocation3], %s161
          %s163 = sand.u32 %s48, 1
          %s164 = smul.addr %s163, 16
          %s165 = scalar_lea.vmem [#allocation2], %s164
          %s166 = smul.u32 2, %s23
          %168 = vsyncadd %s162, 0
          %s169 = smul.addr %s22, 2
          %s170 = sadd.s32 %s166, %s169
          %s171 = smul.addr %s24, 2
          %s172 = sadd.s32 %s170, %s171
          %s173 = smul.addr %s172, 8
          %s174 = scalar_lea.hbm %s0, %s173
          %s176 = sshll.u32 %s174, 4
          %s177 = int_to_ptr.hbm [resolvable:$true] %s176
          %s178 = sshll.u32 %s165, 4
          %s179 = int_to_ptr.vmem [resolvable:$true] %s178
          %181 = dma.hbm_to_vmem [thread:$0]  %s177, 256, %s179, %s162
        $region24: #{tpu_custom_call.1} parent=19 // pred_fallthru
          _
      $region20: #{tpu_custom_call.1} parent=5 // pred_fallthru
        _
      %p182 = scmp.le.s32.totalorder 1, %s15
      %p183 = scmp.lt.s32.totalorder %s15, 3
      %p184 = pnand %p182, %p183
      %p185 = pneg %p184
      // Predicated region
      $region25: #{tpu_custom_call.1} parent=5 // pred_check
        _
      $region26: #{tpu_custom_call.1} parent=5 // pred_check_branch
        %187 = sbr.rel (%p184) target = $region28
      $region27: #{tpu_custom_call.1} parent=5 // pred_region
        %s188 = ssub.s32 %s15, 1
        %s189 = sand.u32 %s51, 1
        %s190 = scalar_lea.sflag [#allocation3], %s189
        %s191 = sand.u32 %s51, 1
        %s192 = smul.addr %s191, 16
        %s193 = scalar_lea.vmem [#allocation2], %s192
        // Predicated region
        $region29: #{tpu_custom_call.1} parent=27 // pred_check
          %p194 = pneg %p64
        $region30: #{tpu_custom_call.1} parent=27 // pred_check_branch
          %196 = sbr.rel (%p194) target = $region32
        $region31: #{tpu_custom_call.1} parent=27 // pred_region
          %198 = dma.done %s190, 256
        $region32: #{tpu_custom_call.1} parent=27 // pred_fallthru
          _
        // Predicated region
        $region33: #{tpu_custom_call.1} parent=27 // pred_check
          %p199 = pneg %p92
        $region34: #{tpu_custom_call.1} parent=27 // pred_check_branch
          %201 = sbr.rel (%p199) target = $region36
        $region35: #{tpu_custom_call.1} parent=27 // pred_region
          %203 = dma.done [#allocation6], 256
        $region36: #{tpu_custom_call.1} parent=27 // pred_fallthru
          _
        %s204 = sand.u32 %s51, 1
        %s205 = scalar_lea.sflag [#allocation3], %s204
        %s206 = sand.u32 %s51, 1
        %s207 = smul.addr %s206, 16
        %s208 = scalar_lea.vmem [#allocation2], %s207
        %p209 = pneg %p64
        %p210 = pneg %p61
        %p211 = pneg %p92
        %p212 = pneg %p89
        %p213 = pneg %p122
        %p214 = pneg %p119
        %s215 = sand.u32 %s109, 1
        %s216 = scalar_lea.sflag [#allocation4], %s215
        %s217 = sand.u32 %s109, 1
        %s218 = smul.addr %s217, 16
        %s219 = scalar_lea.vmem [#allocation7], %s218
        %s220 = smul.u32 2, %s26
        %s221 = smul.u32 2, %s26
        %s222 = smul.u32 2, %s26
        %v223 = vld [vmem:[%s193] sm:$0xff]
        %v224 = vld [vmem:[%s193 + $0x8] sm:$0xff]
        %v225 = vld [vmem:[#allocation5] sm:$0xff]
        %v226 = vld [vmem:[#allocation5 + $0x8] sm:$0xff]
        %v227 = vadd.f32 %v223, %v225
        %v228 = vadd.f32 %v224, %v226
        %229 = vst [vmem:[%s219] sm:$0xff] %v227
        %230 = vst [vmem:[%s219 + $0x8] sm:$0xff] %v228
        %s231 = sand.u32 %s109, 1
        %s232 = scalar_lea.sflag [#allocation4], %s231
        %s233 = sand.u32 %s109, 1
        %s234 = smul.addr %s233, 16
        %s235 = scalar_lea.vmem [#allocation7], %s234
        // Predicated region
        $region37: #{tpu_custom_call.1} parent=27 // pred_check
          %p236 = pneg %p119
        $region38: #{tpu_custom_call.1} parent=27 // pred_check_branch
          %238 = sbr.rel (%p236) target = $region40
        $region39: #{tpu_custom_call.1} parent=27 // pred_region
          %s239 = smul.u32 2, %s26
          %241 = vsyncadd %s232, 0
          %s242 = smul.addr %s25, 2
          %s243 = sadd.s32 %s239, %s242
          %s244 = smul.addr %s27, 2
          %s245 = sadd.s32 %s243, %s244
          %s246 = smul.addr %s245, 8
          %s247 = scalar_lea.hbm %s2, %s246
          %s249 = sshll.u32 %s235, 4
          %s250 = int_to_ptr.vmem [resolvable:$true] %s249
          %s251 = sshll.u32 %s247, 4
          %s252 = int_to_ptr.hbm [resolvable:$true] %s251
          %254 = dma.vmem_to_hbm [thread:$0]  %s250, 256, %s252, %s232
        $region40: #{tpu_custom_call.1} parent=27 // pred_fallthru
          _
      $region28: #{tpu_custom_call.1} parent=5 // pred_fallthru
        _
      %p255 = scmp.le.s32.totalorder 2, %s15
      // Predicated region
      $region41: #{tpu_custom_call.1} parent=5 // pred_check
        %p256 = pneg %p255
      $region42: #{tpu_custom_call.1} parent=5 // pred_check_branch
        %258 = sbr.rel (%p256) target = $region44
      $region43: #{tpu_custom_call.1} parent=5 // pred_region
        %s259 = ssub.s32 %s15, 2
        // Predicated region
        $region45: #{tpu_custom_call.1} parent=43 // pred_check
          %p260 = pneg %p125
        $region46: #{tpu_custom_call.1} parent=43 // pred_check_branch
          %262 = sbr.rel (%p260) target = $region48
        $region47: #{tpu_custom_call.1} parent=43 // pred_region
          %s263 = sand.u32 %s110, 1
          %s264 = scalar_lea.sflag [#allocation4], %s263
          %s265 = sand.u32 %s110, 1
          %s266 = smul.addr %s265, 16
          %s267 = scalar_lea.vmem [#allocation7], %s266
          %269 = dma.done %s264, 256
        $region48: #{tpu_custom_call.1} parent=43 // pred_fallthru
          _
      $region44: #{tpu_custom_call.1} parent=5 // pred_fallthru
        _
    $region6: #{tpu_custom_call.1} parent=1 // loop_footer
      %s19 = sadd.s32 1, %s15
    $region7: #{tpu_custom_call.1} parent=1 // loop_footer_branch
      %14 = sbr.rel target = $region3
    $region8: #{tpu_custom_call.1} parent=1 // loop_exit
      _
    %270 = vsyncpa [#allocation3], 1
    %s271 = scalar_lea.sflag [#allocation3], 1
    %272 = vsyncpa %s271, 1
    %273 = vsyncpa [#allocation6], 1
    %274 = vsyncpa [#allocation4], 1
    %s275 = scalar_lea.sflag [#allocation4], 1
    %276 = vsyncpa %s275, 1

</llo_original>
